<compile_context>
chip_gen: v5e
topology: v5e:2x2
jax: 0.10.0
libtpu: 0.0.40
codegen_flags: <defaults>
</compile_context>

<pallas_src>
import jax
import jax.numpy as jnp
from jax import lax
from jax.experimental import pallas as pl
from jax.experimental.pallas import tpu as pltpu


def rnd_kernel(x_ref, w1_ref, b1_ref, w2_ref, b2_ref, err_ref):
    x = x_ref[...]                                                    # [Bt, D]

    # fused layer 1 (rows 0:H = predictor, rows H:2H = target), contracting
    # over D with RHS transposed -> batch on lanes, then bias + ReLU.
    h = lax.dot_general(
        w1_ref[...], x,
        dimension_numbers=(((1,), (1,)), ((), ())),
        preferred_element_type=jnp.float32,
    ) + b1_ref[...]                                                   # [2H, Bt]
    h = jnp.maximum(h, 0.0)

    # fused layer 2: diff = predictor_out - target_out                 [O, Bt]
    diff = jnp.dot(w2_ref[...], h, preferred_element_type=jnp.float32) + b2_ref[...]

    out_dim = diff.shape[0]
    # per-sample MSE over the output dim -> lane-dense (1, Bt) row
    err_ref[...] = jnp.sum(diff * diff, axis=0, keepdims=True) * (1.0 / out_dim)


def _round_up(n, m):
    return ((n + m - 1) // m) * m


def rnd_forward(x, fused, *, block_b=4096):
    """x: [B, D] float32.  fused: dict from fuse_params().  Returns [B] float32."""
    B, D = x.shape
    H2 = fused["w1"].shape[0]       # 2 * hidden_dim
    O = fused["w2"].shape[0]        # output_dim

    # batch tile: lane-aligned (multiple of 128), clamped to the batch size;
    # prefer >= 2 grid steps so both v7x TensorCores get work.
    bb = min(block_b, _round_up(B, 128))
    if B >= 2 * 128 and pl.cdiv(B, bb) < 2:
        bb = _round_up(pl.cdiv(B, 2), 128)
    n_blocks = pl.cdiv(B, bb)
    B_pad = n_blocks * bb           # output is tiny; tail lanes are sliced off

    weight_bytes = 4 * (fused["w1"].size + fused["b1"].size
                        + fused["w2"].size + fused["b2"].size)
    cost = pl.CostEstimate(
        flops=2 * B * (H2 * D + O * H2),
        transcendentals=0,
        bytes_accessed=B * D * 4 + B * 4 + weight_bytes,
    )

    err_row = pl.pallas_call(
        rnd_kernel,
        out_shape=jax.ShapeDtypeStruct((1, B_pad), jnp.float32),
        grid_spec=pltpu.PrefetchScalarGridSpec(
            num_scalar_prefetch=0,
            grid=(n_blocks,),
            in_specs=[
                pl.BlockSpec((bb, D), lambda i: (i, 0)),         # x tile [Bt, D]
                pl.BlockSpec((H2, D), lambda i: (0, 0)),         # fused W1
                pl.BlockSpec((H2, 1), lambda i: (0, 0)),         # fused b1
                pl.BlockSpec((O, H2), lambda i: (0, 0)),         # fused W2
                pl.BlockSpec((O, 1), lambda i: (0, 0)),          # fused b2
            ],
            out_specs=pl.BlockSpec((1, bb), lambda i: (0, i)),
        ),
        compiler_params=pltpu.CompilerParams(
            dimension_semantics=("parallel",)),      # shard grid across v7x TCs
        cost_estimate=cost,
    )(x, fused["w1"], fused["b1"], fused["w2"], fused["b2"])

    return err_row[0, :B]


def init_params(key, input_dim, hidden_dim=128, output_dim=64):
    """torch.nn.Linear-style init: W [out, in], b [out], U(-1/sqrt(fan_in), ..)."""
    ks = jax.random.split(key, 8)

    def lin(kw, kb, fan_in, fan_out):
        bound = 1.0 / jnp.sqrt(fan_in)
        w = jax.random.uniform(kw, (fan_out, fan_in), jnp.float32, -bound, bound)
        b = jax.random.uniform(kb, (fan_out,), jnp.float32, -bound, bound)
        return w, b

    wt1, bt1 = lin(ks[0], ks[1], input_dim, hidden_dim)
    wt2, bt2 = lin(ks[2], ks[3], hidden_dim, output_dim)
    wp1, bp1 = lin(ks[4], ks[5], input_dim, hidden_dim)
    wp2, bp2 = lin(ks[6], ks[7], hidden_dim, output_dim)
    return dict(wt1=wt1, bt1=bt1, wt2=wt2, bt2=bt2,
                wp1=wp1, bp1=bp1, wp2=wp2, bp2=bp2)


def fuse_params(p):
    """Fuse target+predictor nets for the diff-producing kernel."""
    w1 = jnp.concatenate([p["wp1"], p["wt1"]], axis=0)             # [2H, D]
    b1 = jnp.concatenate([p["bp1"], p["bt1"]], axis=0)[:, None]    # [2H, 1]
    w2 = jnp.concatenate([p["wp2"], -p["wt2"]], axis=1)            # [O, 2H]
    b2 = (p["bp2"] - p["bt2"])[:, None]                            # [O, 1]
    return dict(w1=w1, b1=b1, w2=w2, b2=b2)


def rnd_forward_ref(x, p):
    """Pure-JAX reference matching the torch module exactly."""
    t = jnp.maximum(x @ p["wt1"].T + p["bt1"], 0.0) @ p["wt2"].T + p["bt2"]
    q = jnp.maximum(x @ p["wp1"].T + p["bp1"], 0.0) @ p["wp2"].T + p["bp2"]
    return jnp.mean((q - t) ** 2, axis=1)


# TODO(synk): train_step (backward pass + Adam update) is not translated; this
# kernel implements only the forward pass of RNDDetector.

if __name__ == "__main__":
    key = jax.random.PRNGKey(0)
    k_x, k_p = jax.random.split(key)

    B, D, H, O = 256, 32, 128, 64          # batch, input_dim, hidden, output
    x = jax.random.normal(k_x, (B, D), jnp.float32)
    raw = init_params(k_p, input_dim=D, hidden_dim=H, output_dim=O)
    fused = fuse_params(raw)

    err = rnd_forward(x, fused)            # B=256 -> two 128-wide blocks
    err = jax.block_until_ready(err)

    ref = rnd_forward_ref(x, raw)
    assert err.shape == (B,)
    assert jnp.allclose(err, ref, atol=1e-4, rtol=1e-4), (err, ref)

    # ragged batch exercises the partial-last-block (no wrapper pad) path
    B2 = 100
    err2 = jax.block_until_ready(rnd_forward(x[:B2], fused))
    assert err2.shape == (B2,)
    assert jnp.allclose(err2, ref[:B2], atol=1e-4, rtol=1e-4), (err2, ref[:B2])

    print("KERNEL_OK")
</pallas_src>

<mosaic_0001>
module attributes {stable_mosaic.version = 11 : i64} {
  func.func @rnd_kernel(%arg0: i32, %arg1: memref<128x32xf32, #tpu.memory_space<vmem>>, %arg2: memref<256x32xf32, #tpu.memory_space<vmem>>, %arg3: memref<256x1xf32, #tpu.memory_space<vmem>>, %arg4: memref<64x256xf32, #tpu.memory_space<vmem>>, %arg5: memref<64x1xf32, #tpu.memory_space<vmem>>, %arg6: memref<1x128xf32, #tpu.memory_space<vmem>>) attributes {dimension_semantics = [#tpu.dimension_semantics<parallel>], iteration_bounds = array<i64: 2>, scalar_prefetch = 0 : i64, scratch_operands = 0 : i64, tpu.core_type = #tpu.core_type<tc>, window_params = [{transform_indices = @transform_0, window_bounds = array<i64: 128, 32>}, {pipeline_mode = #tpu.pipeline_mode<synchronous>, transform_indices = @transform_1, window_bounds = array<i64: 256, 32>}, {pipeline_mode = #tpu.pipeline_mode<synchronous>, transform_indices = @transform_2, window_bounds = array<i64: 256, 1>}, {pipeline_mode = #tpu.pipeline_mode<synchronous>, transform_indices = @transform_3, window_bounds = array<i64: 64, 256>}, {pipeline_mode = #tpu.pipeline_mode<synchronous>, transform_indices = @transform_4, window_bounds = array<i64: 64, 1>}, {transform_indices = @transform_5, window_bounds = array<i64: 1, 128>}]} {
    %c0 = arith.constant 0 : index
    %c0_0 = arith.constant 0 : index
    %0 = vector.load %arg1[%c0, %c0_0] : memref<128x32xf32, #tpu.memory_space<vmem>>, vector<128x32xf32>
    %c0_1 = arith.constant 0 : index
    %c0_2 = arith.constant 0 : index
    %1 = vector.load %arg2[%c0_1, %c0_2] : memref<256x32xf32, #tpu.memory_space<vmem>>, vector<256x32xf32>
    %cst = arith.constant dense<0.000000e+00> : vector<256x128xf32>
    %2 = tpu.matmul %1, %0, %cst {dimension_numbers = #tpu.dot_dimension_numbers<[1], [1], [0], [0], [0, 0, 1, 0], [], []>} : vector<256x32xf32>, vector<128x32xf32>, vector<256x128xf32> -> vector<256x128xf32>
    %c0_3 = arith.constant 0 : index
    %c0_4 = arith.constant 0 : index
    %3 = vector.load %arg3[%c0_3, %c0_4] : memref<256x1xf32, #tpu.memory_space<vmem>>, vector<256x1xf32>
    %4 = vector.broadcast %3 : vector<256x1xf32> to vector<256x128xf32>
    %5 = arith.addf %2, %4 : vector<256x128xf32>
    %cst_5 = arith.constant 0.000000e+00 : f32
    %6 = vector.broadcast %cst_5 : f32 to vector<256x128xf32>
    %7 = arith.maximumf %5, %6 : vector<256x128xf32>
    %c0_6 = arith.constant 0 : index
    %c0_7 = arith.constant 0 : index
    %8 = vector.load %arg4[%c0_6, %c0_7] : memref<64x256xf32, #tpu.memory_space<vmem>>, vector<64x256xf32>
    %cst_8 = arith.constant dense<0.000000e+00> : vector<64x128xf32>
    %9 = tpu.matmul %8, %7, %cst_8 {dimension_numbers = #tpu.dot_dimension_numbers<[1], [0], [0], [1], [0, 0, 1, 1], [], []>} : vector<64x256xf32>, vector<256x128xf32>, vector<64x128xf32> -> vector<64x128xf32>
    %c0_9 = arith.constant 0 : index
    %c0_10 = arith.constant 0 : index
    %10 = vector.load %arg5[%c0_9, %c0_10] : memref<64x1xf32, #tpu.memory_space<vmem>>, vector<64x1xf32>
    %11 = vector.broadcast %10 : vector<64x1xf32> to vector<64x128xf32>
    %12 = arith.addf %9, %11 : vector<64x128xf32>
    %13 = arith.mulf %12, %12 : vector<64x128xf32>
    %cst_11 = arith.constant dense<0.000000e+00> : vector<128xf32>
    %14 = vector.multi_reduction <add>, %13, %cst_11 [0] : vector<64x128xf32> to vector<128xf32>
    %15 = vector.shape_cast %14 : vector<128xf32> to vector<1x128xf32>
    %cst_12 = arith.constant 1.562500e-02 : f32
    %16 = vector.broadcast %cst_12 : f32 to vector<1x128xf32>
    %17 = arith.mulf %15, %16 : vector<1x128xf32>
    %c0_13 = arith.constant 0 : index
    %c0_14 = arith.constant 0 : index
    %18 = vector.load %arg6[%c0_13, %c0_14] : memref<1x128xf32, #tpu.memory_space<vmem>>, vector<1x128xf32>
    tpu.vector_store %arg6[%c0_13, %c0_14], %17 {strides = array<i32>} : memref<1x128xf32, #tpu.memory_space<vmem>>, vector<1x128xf32>,
    return
  }
  func.func @transform_0(%arg0: i32) -> (i32, i32) {
    %c0_i32 = arith.constant 0 : i32
    %c0_i32_0 = arith.constant 0 : i32
    return %arg0, %c0_i32 : i32, i32
  }
  func.func @transform_1(%arg0: i32) -> (i32, i32) {
    %c0_i32 = arith.constant 0 : i32
    %c0_i32_0 = arith.constant 0 : i32
    %c0_i32_1 = arith.constant 0 : i32
    return %c0_i32, %c0_i32_0 : i32, i32
  }
  func.func @transform_2(%arg0: i32) -> (i32, i32) {
    %c0_i32 = arith.constant 0 : i32
    %c0_i32_0 = arith.constant 0 : i32
    %c0_i32_1 = arith.constant 0 : i32
    return %c0_i32, %c0_i32_0 : i32, i32
  }
  func.func @transform_3(%arg0: i32) -> (i32, i32) {
    %c0_i32 = arith.constant 0 : i32
    %c0_i32_0 = arith.constant 0 : i32
    %c0_i32_1 = arith.constant 0 : i32
    return %c0_i32, %c0_i32_0 : i32, i32
  }
  func.func @transform_4(%arg0: i32) -> (i32, i32) {
    %c0_i32 = arith.constant 0 : i32
    %c0_i32_0 = arith.constant 0 : i32
    %c0_i32_1 = arith.constant 0 : i32
    return %c0_i32, %c0_i32_0 : i32, i32
  }
  func.func @transform_5(%arg0: i32) -> (i32, i32) {
    %c0_i32 = arith.constant 0 : i32
    %c0_i32_0 = arith.constant 0 : i32
    return %c0_i32, %arg0 : i32, i32
  }
}

</mosaic_0001>

<llo_original>
// kernel: tpu_custom_call.1
$region0: #{tpu_custom_call.1}
  #allocation0 [shape = 'u32[]', space=smem, size = 0x4, offset = 0x4, fixed_abs, tag = 'smem constant byte address 0x4 - core index']
  #allocation1 [shape = 'u32[72,128]{1,0:T(1,128)}', space=vmem, size = 0x9000, scoped, tag = 'internal scratch']
  %s0 = inlined_call_operand.vmem [shape: f32[256,32], index: 0, kind: input, shape index: {}]
  %s1 = inlined_call_operand.vmem [shape: f32[256,32], index: 1, kind: input, shape index: {}]
  %s2 = inlined_call_operand.vmem [shape: f32[256,1], index: 2, kind: input, shape index: {}]
  %s3 = inlined_call_operand.vmem [shape: f32[64,256], index: 3, kind: input, shape index: {}]
  %s4 = inlined_call_operand.vmem [shape: f32[64,1], index: 4, kind: input, shape index: {}]
  %s5 = inlined_call_operand.hbm [shape: f32[1,256], index: 5, kind: output, shape index: {}]
  %s6 = sld [smem:[#allocation0]]
  $region53: #{tpu_custom_call.1} parent=0
    _
  %s8 = ssub.s32 1, %s6
  %s9 = scalar_select 0, %s8, %s6
  $region1: #{tpu_custom_call.1} parent=0
    #allocation2 [shape = 'u8[1024]{0}', space=vmem, size = 0x400, scoped, tag = 'output window, operand 0']
    #allocation3 [shape = 's32[2]{0}', space=sflag, size = 0x8, scoped, tag = 'scoped memory for tpu_custom_call.1']
    %10 = vsyncpa [#allocation3], 0
    %s11 = scalar_lea.sflag [#allocation3], 1
    %12 = vsyncpa %s11, 0
    loop: start=0, step=1, limit=4
    $region2: #{tpu_custom_call.1} parent=1 // loop_pre_header
      _
    $region3: #{tpu_custom_call.1} parent=1 // loop_header
      %s14 = sphi 0, %s18
      %p15 = scmp.ge.s32.totalorder %s14, 4
      %s24 = sphi 0, %s26
      %s27 = sphi 0, %s24
      %s28 = sphi 0, %s27
      %s44 = sphi 0, %s28
      %s48 = sphi 0, %s48
      %s50 = sphi 0, %s48
      %s51 = sphi 0, %s50
      %s65 = sphi 0, %s51
      %s69 = sphi 0, %s69
      %s71 = sphi 0, %s69
      %s72 = sphi 0, %s71
      %s86 = sphi 0, %s72
      %s90 = sphi 0, %s90
      %s92 = sphi 0, %s90
      %s93 = sphi 0, %s92
      %s107 = sphi 0, %s93
      %s111 = sphi 0, %s111
      %s113 = sphi 0, %s111
      %s114 = sphi 0, %s113
      %s128 = sphi 0, %s114
      %s134 = sphi 0, %s136
      %s137 = sphi 0, %s134
      %s138 = sphi 0, %s137
      %s154 = sphi 0, %s138
    $region4: #{tpu_custom_call.1} parent=1 // loop_header_branch
      %17 = sbr.rel (%p15) target = $region8
    $region5: #{tpu_custom_call.1} parent=1 // loop_body
      %s19 = ssub.s32 %s14, 1
      %s20 = ssub.s32 %s14, 2
      %s21 = sadd.s32 %s14, 1
      %s22 = ssub.s32 %s14, %s21
      %p23 = scmp.eq.s32.totalorder %s22, 0
      %s25 = sadd.s32 %s24, 1
      %s26 = scalar_select %p23, %s24, %s25
      %p29 = pneg %p23
      %p30 = scmp.eq.s32.totalorder %s14, 1
      %p31 = por %p29, %p30
      %p32 = scmp.ne.s32.totalorder %s24, %s27
      %p33 = scmp.eq.s32.totalorder %s14, 0
      %p34 = por %p32, %p33
      %p35 = scmp.ne.s32.totalorder %s24, %s27
      %p36 = scmp.eq.s32.totalorder %s19, 1
      %p37 = por %p35, %p36
      %p38 = scmp.ne.s32.totalorder %s27, %s28
      %p39 = scmp.eq.s32.totalorder %s19, 0
      %p40 = por %p38, %p39
      %p41 = scmp.ne.s32.totalorder %s27, %s28
      %p42 = scmp.eq.s32.totalorder %s20, 1
      %p43 = por %p41, %p42
      %p45 = scmp.ne.s32.totalorder %s28, %s44
      %p46 = scmp.eq.s32.totalorder %s20, 0
      %p47 = por %p45, %p46
      %s49 = sadd.s32 %s48, 1
      %p52 = scmp.eq.s32.totalorder %s14, 1
      %p53 = scmp.ne.s32.totalorder %s48, %s50
      %p54 = scmp.eq.s32.totalorder %s14, 0
      %p55 = por %p53, %p54
      %p56 = scmp.ne.s32.totalorder %s48, %s50
      %p57 = scmp.eq.s32.totalorder %s19, 1
      %p58 = por %p56, %p57
      %p59 = scmp.ne.s32.totalorder %s50, %s51
      %p60 = scmp.eq.s32.totalorder %s19, 0
      %p61 = por %p59, %p60
      %p62 = scmp.ne.s32.totalorder %s50, %s51
      %p63 = scmp.eq.s32.totalorder %s20, 1
      %p64 = por %p62, %p63
      %p66 = scmp.ne.s32.totalorder %s51, %s65
      %p67 = scmp.eq.s32.totalorder %s20, 0
      %p68 = por %p66, %p67
      %s70 = sadd.s32 %s69, 1
      %p73 = scmp.eq.s32.totalorder %s14, 1
      %p74 = scmp.ne.s32.totalorder %s69, %s71
      %p75 = scmp.eq.s32.totalorder %s14, 0
      %p76 = por %p74, %p75
      %p77 = scmp.ne.s32.totalorder %s69, %s71
      %p78 = scmp.eq.s32.totalorder %s19, 1
      %p79 = por %p77, %p78
      %p80 = scmp.ne.s32.totalorder %s71, %s72
      %p81 = scmp.eq.s32.totalorder %s19, 0
      %p82 = por %p80, %p81
      %p83 = scmp.ne.s32.totalorder %s71, %s72
      %p84 = scmp.eq.s32.totalorder %s20, 1
      %p85 = por %p83, %p84
      %p87 = scmp.ne.s32.totalorder %s72, %s86
      %p88 = scmp.eq.s32.totalorder %s20, 0
      %p89 = por %p87, %p88
      %s91 = sadd.s32 %s90, 1
      %p94 = scmp.eq.s32.totalorder %s14, 1
      %p95 = scmp.ne.s32.totalorder %s90, %s92
      %p96 = scmp.eq.s32.totalorder %s14, 0
      %p97 = por %p95, %p96
      %p98 = scmp.ne.s32.totalorder %s90, %s92
      %p99 = scmp.eq.s32.totalorder %s19, 1
      %p100 = por %p98, %p99
      %p101 = scmp.ne.s32.totalorder %s92, %s93
      %p102 = scmp.eq.s32.totalorder %s19, 0
      %p103 = por %p101, %p102
      %p104 = scmp.ne.s32.totalorder %s92, %s93
      %p105 = scmp.eq.s32.totalorder %s20, 1
      %p106 = por %p104, %p105
      %p108 = scmp.ne.s32.totalorder %s93, %s107
      %p109 = scmp.eq.s32.totalorder %s20, 0
      %p110 = por %p108, %p109
      %s112 = sadd.s32 %s111, 1
      %p115 = scmp.eq.s32.totalorder %s14, 1
      %p116 = scmp.ne.s32.totalorder %s111, %s113
      %p117 = scmp.eq.s32.totalorder %s14, 0
      %p118 = por %p116, %p117
      %p119 = scmp.ne.s32.totalorder %s111, %s113
      %p120 = scmp.eq.s32.totalorder %s19, 1
      %p121 = por %p119, %p120
      %p122 = scmp.ne.s32.totalorder %s113, %s114
      %p123 = scmp.eq.s32.totalorder %s19, 0
      %p124 = por %p122, %p123
      %p125 = scmp.ne.s32.totalorder %s113, %s114
      %p126 = scmp.eq.s32.totalorder %s20, 1
      %p127 = por %p125, %p126
      %p129 = scmp.ne.s32.totalorder %s114, %s128
      %p130 = scmp.eq.s32.totalorder %s20, 0
      %p131 = por %p129, %p130
      %s132 = ssub.s32 %s14, %s21
      %p133 = scmp.eq.s32.totalorder %s132, 0
      %s135 = sadd.s32 %s134, 1
      %s136 = scalar_select %p133, %s134, %s135
      %p139 = pneg %p133
      %p140 = scmp.eq.s32.totalorder %s14, 1
      %p141 = por %p139, %p140
      %p142 = scmp.ne.s32.totalorder %s134, %s137
      %p143 = scmp.eq.s32.totalorder %s14, 0
      %p144 = por %p142, %p143
      %p145 = scmp.ne.s32.totalorder %s134, %s137
      %p146 = scmp.eq.s32.totalorder %s19, 1
      %p147 = por %p145, %p146
      %p148 = scmp.ne.s32.totalorder %s137, %s138
      %p149 = scmp.eq.s32.totalorder %s19, 0
      %p150 = por %p148, %p149
      %p151 = scmp.ne.s32.totalorder %s137, %s138
      %p152 = scmp.eq.s32.totalorder %s20, 1
      %p153 = por %p151, %p152
      %p155 = scmp.ne.s32.totalorder %s138, %s154
      %p156 = scmp.eq.s32.totalorder %s20, 0
      %p157 = por %p155, %p156
      %p158 = scmp.le.s32.totalorder 1, %s14
      %p159 = scmp.lt.s32.totalorder %s14, 3
      %p160 = pnand %p158, %p159
      %p161 = pneg %p160
      // Predicated region
      $region9: #{tpu_custom_call.1} parent=5 // pred_check
        _
      $region10: #{tpu_custom_call.1} parent=5 // pred_check_branch
        %163 = sbr.rel (%p160) target = $region12
      $region11: #{tpu_custom_call.1} parent=5 // pred_region
        %s164 = ssub.s32 %s14, 1
        // Predicated region
        $region13: #{tpu_custom_call.1} parent=11 // pred_check
          %p165 = pneg %p61
        $region14: #{tpu_custom_call.1} parent=11 // pred_check_branch
          %167 = sbr.rel (%p165) target = $region16
        $region15: #{tpu_custom_call.1} parent=11 // pred_region
          _
        $region16: #{tpu_custom_call.1} parent=11 // pred_fallthru
          _
        // Predicated region
        $region17: #{tpu_custom_call.1} parent=11 // pred_check
          %p168 = pneg %p82
        $region18: #{tpu_custom_call.1} parent=11 // pred_check_branch
          %170 = sbr.rel (%p168) target = $region20
        $region19: #{tpu_custom_call.1} parent=11 // pred_region
          _
        $region20: #{tpu_custom_call.1} parent=11 // pred_fallthru
          _
        // Predicated region
        $region21: #{tpu_custom_call.1} parent=11 // pred_check
          %p171 = pneg %p103
        $region22: #{tpu_custom_call.1} parent=11 // pred_check_branch
          %173 = sbr.rel (%p171) target = $region24
        $region23: #{tpu_custom_call.1} parent=11 // pred_region
          _
        $region24: #{tpu_custom_call.1} parent=11 // pred_fallthru
          _
        // Predicated region
        $region25: #{tpu_custom_call.1} parent=11 // pred_check
          %p174 = pneg %p124
        $region26: #{tpu_custom_call.1} parent=11 // pred_check_branch
          %176 = sbr.rel (%p174) target = $region28
        $region27: #{tpu_custom_call.1} parent=11 // pred_region
          _
        $region28: #{tpu_custom_call.1} parent=11 // pred_fallthru
          _
      $region12: #{tpu_custom_call.1} parent=5 // pred_fallthru
        _
      %p177 = scmp.lt.s32.totalorder %s14, 2
      // Predicated region
      $region29: #{tpu_custom_call.1} parent=5 // pred_check
        %p178 = pneg %p177
      $region30: #{tpu_custom_call.1} parent=5 // pred_check_branch
        %180 = sbr.rel (%p178) target = $region32
      $region31: #{tpu_custom_call.1} parent=5 // pred_region
        // Predicated region
        $region33: #{tpu_custom_call.1} parent=31 // pred_check
          %p181 = pneg %p34
        $region34: #{tpu_custom_call.1} parent=31 // pred_check_branch
          %183 = sbr.rel (%p181) target = $region36
        $region35: #{tpu_custom_call.1} parent=31 // pred_region
          %s184 = smul.u32 16, %s14
          %p185 = scmp.lt.s32.totalorder %s184, 31
          %s186 = scalar_select %p185, %s184, 31
          %s187 = smul.addr %s186, 8
          %s188 = scalar_lea.vmem %s0, %s187
          %s189 = smul.u32 16, %s14
        $region36: #{tpu_custom_call.1} parent=31 // pred_fallthru
          _
      $region32: #{tpu_custom_call.1} parent=5 // pred_fallthru
        _
      %p190 = scmp.le.s32.totalorder 1, %s14
      %p191 = scmp.lt.s32.totalorder %s14, 3
      %p192 = pnand %p190, %p191
      %p193 = pneg %p192
      // Predicated region
      $region37: #{tpu_custom_call.1} parent=5 // pred_check
        _
      $region38: #{tpu_custom_call.1} parent=5 // pred_check_branch
        %195 = sbr.rel (%p192) target = $region40
      $region39: #{tpu_custom_call.1} parent=5 // pred_region
        %s196 = ssub.s32 %s14, 1
        %s197 = smul.u32 16, %s19
        %p198 = scmp.lt.s32.totalorder %s197, 31
        %s199 = scalar_select %p198, %s197, 31
        %s200 = smul.addr %s199, 8
        %s201 = scalar_lea.vmem %s0, %s200
        %p202 = pneg %p40
        %p203 = pneg %p37
        %p204 = pneg %p61
        %p205 = pneg %p58
        %p206 = pneg %p82
        %p207 = pneg %p79
        %p208 = pneg %p103
        %p209 = pneg %p100
        %p210 = pneg %p124
        %p211 = pneg %p121
        %p212 = pneg %p150
        %p213 = pneg %p147
        %s214 = sand.u32 %s137, 1
        %s215 = scalar_lea.sflag [#allocation3], %s214
        %s216 = sand.u32 %s137, 1
        %s217 = scalar_lea.vmem [#allocation2], %s216
        %s218 = smul.u32 16, %s19
        %p219 = scmp.lt.s32.totalorder %s218, 31
        %s220 = scalar_select %p219, %s218, 31
        %s221 = smul.addr %s220, 8
        %s222 = scalar_lea.vmem %s0, %s221
        %s223 = smul.u32 16, %s19
        %v224 = vld [vmem:[%s222] sm:$0xff]
        %v225 = vld [vmem:[%s222 + $0x8] sm:$0xff]
        %v226 = vld [vmem:[%s222 + $0x10] sm:$0xff]
        %v227 = vld [vmem:[%s222 + $0x18] sm:$0xff]
        %v228 = vld [vmem:[%s222 + $0x20] sm:$0xff]
        %v229 = vld [vmem:[%s222 + $0x28] sm:$0xff]
        %v230 = vld [vmem:[%s222 + $0x30] sm:$0xff]
        %v231 = vld [vmem:[%s222 + $0x38] sm:$0xff]
        %v232 = vld [vmem:[%s222 + $0x40] sm:$0xff]
        %v233 = vld [vmem:[%s222 + $0x48] sm:$0xff]
        %v234 = vld [vmem:[%s222 + $0x50] sm:$0xff]
        %v235 = vld [vmem:[%s222 + $0x58] sm:$0xff]
        %v236 = vld [vmem:[%s222 + $0x60] sm:$0xff]
        %v237 = vld [vmem:[%s222 + $0x68] sm:$0xff]
        %v238 = vld [vmem:[%s222 + $0x70] sm:$0xff]
        %v239 = vld [vmem:[%s222 + $0x78] sm:$0xff]
        %v240 = vld [vmem:[%s1] sm:$0xff]
        %v241 = vld [vmem:[%s1 + $0x8] sm:$0xff]
        %v242 = vld [vmem:[%s1 + $0x10] sm:$0xff]
        %v243 = vld [vmem:[%s1 + $0x18] sm:$0xff]
        %v244 = vld [vmem:[%s1 + $0x20] sm:$0xff]
        %v245 = vld [vmem:[%s1 + $0x28] sm:$0xff]
        %v246 = vld [vmem:[%s1 + $0x30] sm:$0xff]
        %v247 = vld [vmem:[%s1 + $0x38] sm:$0xff]
        %v248 = vld [vmem:[%s1 + $0x40] sm:$0xff]
        %v249 = vld [vmem:[%s1 + $0x48] sm:$0xff]
        %v250 = vld [vmem:[%s1 + $0x50] sm:$0xff]
        %v251 = vld [vmem:[%s1 + $0x58] sm:$0xff]
        %v252 = vld [vmem:[%s1 + $0x60] sm:$0xff]
        %v253 = vld [vmem:[%s1 + $0x68] sm:$0xff]
        %v254 = vld [vmem:[%s1 + $0x70] sm:$0xff]
        %v255 = vld [vmem:[%s1 + $0x78] sm:$0xff]
        %v256 = vld [vmem:[%s1 + $0x80] sm:$0xff]
        %v257 = vld [vmem:[%s1 + $0x88] sm:$0xff]
        %v258 = vld [vmem:[%s1 + $0x90] sm:$0xff]
        %v259 = vld [vmem:[%s1 + $0x98] sm:$0xff]
        %v260 = vld [vmem:[%s1 + $0xa0] sm:$0xff]
        %v261 = vld [vmem:[%s1 + $0xa8] sm:$0xff]
        %v262 = vld [vmem:[%s1 + $0xb0] sm:$0xff]
        %v263 = vld [vmem:[%s1 + $0xb8] sm:$0xff]
        %v264 = vld [vmem:[%s1 + $0xc0] sm:$0xff]
        %v265 = vld [vmem:[%s1 + $0xc8] sm:$0xff]
        %v266 = vld [vmem:[%s1 + $0xd0] sm:$0xff]
        %v267 = vld [vmem:[%s1 + $0xd8] sm:$0xff]
        %v268 = vld [vmem:[%s1 + $0xe0] sm:$0xff]
        %v269 = vld [vmem:[%s1 + $0xe8] sm:$0xff]
        %v270 = vld [vmem:[%s1 + $0xf0] sm:$0xff]
        %v271 = vld [vmem:[%s1 + $0xf8] sm:$0xff]
        %v272 = vld [vmem:[%s2] sm:$0xff]
        %v273 = vld [vmem:[%s2 + $0x8] sm:$0xff]
        %v274 = vld [vmem:[%s2 + $0x10] sm:$0xff]
        %v275 = vld [vmem:[%s2 + $0x18] sm:$0xff]
        %v276 = vld [vmem:[%s2 + $0x20] sm:$0xff]
        %v277 = vld [vmem:[%s2 + $0x28] sm:$0xff]
        %v278 = vld [vmem:[%s2 + $0x30] sm:$0xff]
        %v279 = vld [vmem:[%s2 + $0x38] sm:$0xff]
        %v280 = vld [vmem:[%s2 + $0x40] sm:$0xff]
        %v281 = vld [vmem:[%s2 + $0x48] sm:$0xff]
        %v282 = vld [vmem:[%s2 + $0x50] sm:$0xff]
        %v283 = vld [vmem:[%s2 + $0x58] sm:$0xff]
        %v284 = vld [vmem:[%s2 + $0x60] sm:$0xff]
        %v285 = vld [vmem:[%s2 + $0x68] sm:$0xff]
        %v286 = vld [vmem:[%s2 + $0x70] sm:$0xff]
        %v287 = vld [vmem:[%s2 + $0x78] sm:$0xff]
        %v288 = vld [vmem:[%s2 + $0x80] sm:$0xff]
        %v289 = vld [vmem:[%s2 + $0x88] sm:$0xff]
        %v290 = vld [vmem:[%s2 + $0x90] sm:$0xff]
        %v291 = vld [vmem:[%s2 + $0x98] sm:$0xff]
        %v292 = vld [vmem:[%s2 + $0xa0] sm:$0xff]
        %v293 = vld [vmem:[%s2 + $0xa8] sm:$0xff]
        %v294 = vld [vmem:[%s2 + $0xb0] sm:$0xff]
        %v295 = vld [vmem:[%s2 + $0xb8] sm:$0xff]
        %v296 = vld [vmem:[%s2 + $0xc0] sm:$0xff]
        %v297 = vld [vmem:[%s2 + $0xc8] sm:$0xff]
        %v298 = vld [vmem:[%s2 + $0xd0] sm:$0xff]
        %v299 = vld [vmem:[%s2 + $0xd8] sm:$0xff]
        %v300 = vld [vmem:[%s2 + $0xe0] sm:$0xff]
        %v301 = vld [vmem:[%s2 + $0xe8] sm:$0xff]
        %v302 = vld [vmem:[%s2 + $0xf0] sm:$0xff]
        %v303 = vld [vmem:[%s2 + $0xf8] sm:$0xff]
        %305 = vset.pattern.permute.xlu0 0
        %306 = vperm.xlu0 %305, %v272
        %v307 = vpop.permute.xlu0 %306
        %310 = vset.pattern.permute.xlu0 0
        %311 = vperm.xlu0 %310, %v273
        %v312 = vpop.permute.xlu0 %311
        %315 = vset.pattern.permute.xlu0 0
        %316 = vperm.xlu0 %315, %v274
        %v317 = vpop.permute.xlu0 %316
        %320 = vset.pattern.permute.xlu0 0
        %321 = vperm.xlu0 %320, %v275
        %v322 = vpop.permute.xlu0 %321
        %325 = vset.pattern.permute.xlu0 0
        %326 = vperm.xlu0 %325, %v276
        %v327 = vpop.permute.xlu0 %326
        %330 = vset.pattern.permute.xlu0 0
        %331 = vperm.xlu0 %330, %v277
        %v332 = vpop.permute.xlu0 %331
        %335 = vset.pattern.permute.xlu0 0
        %336 = vperm.xlu0 %335, %v278
        %v337 = vpop.permute.xlu0 %336
        %340 = vset.pattern.permute.xlu0 0
        %341 = vperm.xlu0 %340, %v279
        %v342 = vpop.permute.xlu0 %341
        %345 = vset.pattern.permute.xlu0 0
        %346 = vperm.xlu0 %345, %v280
        %v347 = vpop.permute.xlu0 %346
        %350 = vset.pattern.permute.xlu0 0
        %351 = vperm.xlu0 %350, %v281
        %v352 = vpop.permute.xlu0 %351
        %355 = vset.pattern.permute.xlu0 0
        %356 = vperm.xlu0 %355, %v282
        %v357 = vpop.permute.xlu0 %356
        %360 = vset.pattern.permute.xlu0 0
        %361 = vperm.xlu0 %360, %v283
        %v362 = vpop.permute.xlu0 %361
        %365 = vset.pattern.permute.xlu0 0
        %366 = vperm.xlu0 %365, %v284
        %v367 = vpop.permute.xlu0 %366
        %370 = vset.pattern.permute.xlu0 0
        %371 = vperm.xlu0 %370, %v285
        %v372 = vpop.permute.xlu0 %371
        %375 = vset.pattern.permute.xlu0 0
        %376 = vperm.xlu0 %375, %v286
        %v377 = vpop.permute.xlu0 %376
        %380 = vset.pattern.permute.xlu0 0
        %381 = vperm.xlu0 %380, %v287
        %v382 = vpop.permute.xlu0 %381
        %385 = vset.pattern.permute.xlu0 0
        %386 = vperm.xlu0 %385, %v288
        %v387 = vpop.permute.xlu0 %386
        %390 = vset.pattern.permute.xlu0 0
        %391 = vperm.xlu0 %390, %v289
        %v392 = vpop.permute.xlu0 %391
        %395 = vset.pattern.permute.xlu0 0
        %396 = vperm.xlu0 %395, %v290
        %v397 = vpop.permute.xlu0 %396
        %400 = vset.pattern.permute.xlu0 0
        %401 = vperm.xlu0 %400, %v291
        %v402 = vpop.permute.xlu0 %401
        %405 = vset.pattern.permute.xlu0 0
        %406 = vperm.xlu0 %405, %v292
        %v407 = vpop.permute.xlu0 %406
        %410 = vset.pattern.permute.xlu0 0
        %411 = vperm.xlu0 %410, %v293
        %v412 = vpop.permute.xlu0 %411
        %415 = vset.pattern.permute.xlu0 0
        %416 = vperm.xlu0 %415, %v294
        %v417 = vpop.permute.xlu0 %416
        %420 = vset.pattern.permute.xlu0 0
        %421 = vperm.xlu0 %420, %v295
        %v422 = vpop.permute.xlu0 %421
        %425 = vset.pattern.permute.xlu0 0
        %426 = vperm.xlu0 %425, %v296
        %v427 = vpop.permute.xlu0 %426
        %430 = vset.pattern.permute.xlu0 0
        %431 = vperm.xlu0 %430, %v297
        %v432 = vpop.permute.xlu0 %431
        %435 = vset.pattern.permute.xlu0 0
        %436 = vperm.xlu0 %435, %v298
        %v437 = vpop.permute.xlu0 %436
        %440 = vset.pattern.permute.xlu0 0
        %441 = vperm.xlu0 %440, %v299
        %v442 = vpop.permute.xlu0 %441
        %445 = vset.pattern.permute.xlu0 0
        %446 = vperm.xlu0 %445, %v300
        %v447 = vpop.permute.xlu0 %446
        %450 = vset.pattern.permute.xlu0 0
        %451 = vperm.xlu0 %450, %v301
        %v452 = vpop.permute.xlu0 %451
        %455 = vset.pattern.permute.xlu0 0
        %456 = vperm.xlu0 %455, %v302
        %v457 = vpop.permute.xlu0 %456
        %460 = vset.pattern.permute.xlu0 0
        %461 = vperm.xlu0 %460, %v303
        %v462 = vpop.permute.xlu0 %461
        %vm464 = vcmask 261120
        %v466 = vsel %vm464, %v240, 0
        %v469 = vsel %vm464, %v241, 0
        %v472 = vsel %vm464, %v242, 0
        %v475 = vsel %vm464, %v243, 0
        %v478 = vsel %vm464, %v244, 0
        %v481 = vsel %vm464, %v245, 0
        %v484 = vsel %vm464, %v246, 0
        %v487 = vsel %vm464, %v247, 0
        %v490 = vsel %vm464, %v248, 0
        %v493 = vsel %vm464, %v249, 0
        %v496 = vsel %vm464, %v250, 0
        %v499 = vsel %vm464, %v251, 0
        %v502 = vsel %vm464, %v252, 0
        %v505 = vsel %vm464, %v253, 0
        %v508 = vsel %vm464, %v254, 0
        %v511 = vsel %vm464, %v255, 0
        %v514 = vsel %vm464, %v256, 0
        %v517 = vsel %vm464, %v257, 0
        %v520 = vsel %vm464, %v258, 0
        %v523 = vsel %vm464, %v259, 0
        %v526 = vsel %vm464, %v260, 0
        %v529 = vsel %vm464, %v261, 0
        %v532 = vsel %vm464, %v262, 0
        %v535 = vsel %vm464, %v263, 0
        %v538 = vsel %vm464, %v264, 0
        %v541 = vsel %vm464, %v265, 0
        %v544 = vsel %vm464, %v266, 0
        %v547 = vsel %vm464, %v267, 0
        %v550 = vsel %vm464, %v268, 0
        %v553 = vsel %vm464, %v269, 0
        %v556 = vsel %vm464, %v270, 0
        %v559 = vsel %vm464, %v271, 0
        %v562 = vsel %vm464, %v224, 0
        %v565 = vsel %vm464, %v225, 0
        %v568 = vsel %vm464, %v226, 0
        %v571 = vsel %vm464, %v227, 0
        %v574 = vsel %vm464, %v228, 0
        %v577 = vsel %vm464, %v229, 0
        %v580 = vsel %vm464, %v230, 0
        %v583 = vsel %vm464, %v231, 0
        %v586 = vsel %vm464, %v232, 0
        %v589 = vsel %vm464, %v233, 0
        %v592 = vsel %vm464, %v234, 0
        %v595 = vsel %vm464, %v235, 0
        %v598 = vsel %vm464, %v236, 0
        %v601 = vsel %vm464, %v237, 0
        %v604 = vsel %vm464, %v238, 0
        %v607 = vsel %vm464, %v239, 0
        %609 = vmatpush.xpose.msra.mxu0 %v607
        %610 = vmatpush.xpose.msra.mxu0 %v604
        %611 = vmatpush.xpose.msra.mxu0 %v601
        %612 = vmatpush.xpose.msra.mxu0 %v598
        %613 = vmatpush.xpose.msra.mxu0 %v595
        %614 = vmatpush.xpose.msra.mxu0 %v592
        %615 = vmatpush.xpose.msra.mxu0 %v589
        %616 = vmatpush.xpose.msra.mxu0 %v586
        %617 = vmatpush.xpose.msra.mxu0 %v583
        %618 = vmatpush.xpose.msra.mxu0 %v580
        %619 = vmatpush.xpose.msra.mxu0 %v577
        %620 = vmatpush.xpose.msra.mxu0 %v574
        %621 = vmatpush.xpose.msra.mxu0 %v571
        %622 = vmatpush.xpose.msra.mxu0 %v568
        %623 = vmatpush.xpose.msra.mxu0 %v565
        %624 = vmatpush.xpose.msra.mxu0 %v562
        %625 = vmatmul.f32.gmra.mxu0 %v466
        %v626 = vpop.f32.mrf.mxu0
        %v627 = vadd.f32 %v307, %v626
        %628 = vmatmul.f32.gmra.mxu0 %v469
        %v629 = vpop.f32.mrf.mxu0
        %v630 = vadd.f32 %v312, %v629
        %631 = vmatmul.f32.gmra.mxu0 %v472
        %v632 = vpop.f32.mrf.mxu0
        %v633 = vadd.f32 %v317, %v632
        %634 = vmatmul.f32.gmra.mxu0 %v475
        %v635 = vpop.f32.mrf.mxu0
        %v636 = vadd.f32 %v322, %v635
        %637 = vmatmul.f32.gmra.mxu0 %v478
        %v638 = vpop.f32.mrf.mxu0
        %v639 = vadd.f32 %v327, %v638
        %640 = vmatmul.f32.gmra.mxu0 %v481
        %v641 = vpop.f32.mrf.mxu0
        %v642 = vadd.f32 %v332, %v641
        %643 = vmatmul.f32.gmra.mxu0 %v484
        %v644 = vpop.f32.mrf.mxu0
        %v645 = vadd.f32 %v337, %v644
        %646 = vmatmul.f32.gmra.mxu0 %v487
        %v647 = vpop.f32.mrf.mxu0
        %v648 = vadd.f32 %v342, %v647
        %649 = vmatmul.f32.gmra.mxu0 %v490
        %v650 = vpop.f32.mrf.mxu0
        %v651 = vadd.f32 %v347, %v650
        %652 = vmatmul.f32.gmra.mxu0 %v493
        %v653 = vpop.f32.mrf.mxu0
        %v654 = vadd.f32 %v352, %v653
        %655 = vmatmul.f32.gmra.mxu0 %v496
        %v656 = vpop.f32.mrf.mxu0
        %v657 = vadd.f32 %v357, %v656
        %658 = vmatmul.f32.gmra.mxu0 %v499
        %v659 = vpop.f32.mrf.mxu0
        %v660 = vadd.f32 %v362, %v659
        %661 = vmatmul.f32.gmra.mxu0 %v502
        %v662 = vpop.f32.mrf.mxu0
        %v663 = vadd.f32 %v367, %v662
        %664 = vmatmul.f32.gmra.mxu0 %v505
        %v665 = vpop.f32.mrf.mxu0
        %v666 = vadd.f32 %v372, %v665
        %667 = vmatmul.f32.gmra.mxu0 %v508
        %v668 = vpop.f32.mrf.mxu0
        %v669 = vadd.f32 %v377, %v668
        %670 = vmatmul.f32.gmra.mxu0 %v511
        %v671 = vpop.f32.mrf.mxu0
        %v672 = vadd.f32 %v382, %v671
        %673 = vmatmul.f32.gmra.mxu0 %v514
        %v674 = vpop.f32.mrf.mxu0
        %v675 = vadd.f32 %v387, %v674
        %676 = vmatmul.f32.gmra.mxu0 %v517
        %v677 = vpop.f32.mrf.mxu0
        %v678 = vadd.f32 %v392, %v677
        %679 = vmatmul.f32.gmra.mxu0 %v520
        %v680 = vpop.f32.mrf.mxu0
        %v681 = vadd.f32 %v397, %v680
        %682 = vmatmul.f32.gmra.mxu0 %v523
        %v683 = vpop.f32.mrf.mxu0
        %v684 = vadd.f32 %v402, %v683
        %685 = vmatmul.f32.gmra.mxu0 %v526
        %v686 = vpop.f32.mrf.mxu0
        %v687 = vadd.f32 %v407, %v686
        %688 = vmatmul.f32.gmra.mxu0 %v529
        %v689 = vpop.f32.mrf.mxu0
        %v690 = vadd.f32 %v412, %v689
        %691 = vmatmul.f32.gmra.mxu0 %v532
        %v692 = vpop.f32.mrf.mxu0
        %v693 = vadd.f32 %v417, %v692
        %694 = vmatmul.f32.gmra.mxu0 %v535
        %v695 = vpop.f32.mrf.mxu0
        %v696 = vadd.f32 %v422, %v695
        %697 = vmatmul.f32.gmra.mxu0 %v538
        %v698 = vpop.f32.mrf.mxu0
        %v699 = vadd.f32 %v427, %v698
        %700 = vmatmul.f32.gmra.mxu0 %v541
        %v701 = vpop.f32.mrf.mxu0
        %v702 = vadd.f32 %v432, %v701
        %703 = vmatmul.f32.gmra.mxu0 %v544
        %v704 = vpop.f32.mrf.mxu0
        %v705 = vadd.f32 %v437, %v704
        %706 = vmatmul.f32.gmra.mxu0 %v547
        %v707 = vpop.f32.mrf.mxu0
        %v708 = vadd.f32 %v442, %v707
        %709 = vmatmul.f32.gmra.mxu0 %v550
        %v710 = vpop.f32.mrf.mxu0
        %v711 = vadd.f32 %v447, %v710
        %712 = vmatmul.f32.gmra.mxu0 %v553
        %v713 = vpop.f32.mrf.mxu0
        %v714 = vadd.f32 %v452, %v713
        %715 = vmatmul.f32.gmra.mxu0 %v556
        %v716 = vpop.f32.mrf.mxu0
        %v717 = vadd.f32 %v457, %v716
        %718 = vmatmul.f32.gmra.mxu0 %v559
        %v719 = vpop.f32.mrf.mxu0
        %v720 = vadd.f32 %v462, %v719
        %721 = vdwg.mxu0
        %v722 = vmax.f32 %v627, 0.0
        %v723 = vmax.f32 %v630, 0.0
        %v724 = vmax.f32 %v633, 0.0
        %v725 = vmax.f32 %v636, 0.0
        %v726 = vmax.f32 %v639, 0.0
        %v727 = vmax.f32 %v642, 0.0
        %v728 = vmax.f32 %v645, 0.0
        %v729 = vmax.f32 %v648, 0.0
        %v730 = vmax.f32 %v651, 0.0
        %v731 = vmax.f32 %v654, 0.0
        %v732 = vmax.f32 %v657, 0.0
        %v733 = vmax.f32 %v660, 0.0
        %v734 = vmax.f32 %v663, 0.0
        %v735 = vmax.f32 %v666, 0.0
        %v736 = vmax.f32 %v669, 0.0
        %v737 = vmax.f32 %v672, 0.0
        %v738 = vmax.f32 %v675, 0.0
        %v739 = vmax.f32 %v678, 0.0
        %v740 = vmax.f32 %v681, 0.0
        %v741 = vmax.f32 %v684, 0.0
        %v742 = vmax.f32 %v687, 0.0
        %v743 = vmax.f32 %v690, 0.0
        %v744 = vmax.f32 %v693, 0.0
        %v745 = vmax.f32 %v696, 0.0
        %v746 = vmax.f32 %v699, 0.0
        %v747 = vmax.f32 %v702, 0.0
        %v748 = vmax.f32 %v705, 0.0
        %v749 = vmax.f32 %v708, 0.0
        %v750 = vmax.f32 %v711, 0.0
        %v751 = vmax.f32 %v714, 0.0
        %v752 = vmax.f32 %v717, 0.0
        %v753 = vmax.f32 %v720, 0.0
        %v754 = vld [vmem:[%s3] sm:$0xff]
        %v755 = vld [vmem:[%s3 + $0x8] sm:$0xff]
        %v756 = vld [vmem:[%s3 + $0x10] sm:$0xff]
        %v757 = vld [vmem:[%s3 + $0x18] sm:$0xff]
        %v758 = vld [vmem:[%s3 + $0x20] sm:$0xff]
        %v759 = vld [vmem:[%s3 + $0x28] sm:$0xff]
        %v760 = vld [vmem:[%s3 + $0x30] sm:$0xff]
        %v761 = vld [vmem:[%s3 + $0x38] sm:$0xff]
        %v762 = vld [vmem:[%s3 + $0x40] sm:$0xff]
        %v763 = vld [vmem:[%s3 + $0x48] sm:$0xff]
        %v764 = vld [vmem:[%s3 + $0x50] sm:$0xff]
        %v765 = vld [vmem:[%s3 + $0x58] sm:$0xff]
        %v766 = vld [vmem:[%s3 + $0x60] sm:$0xff]
        %v767 = vld [vmem:[%s3 + $0x68] sm:$0xff]
        %v768 = vld [vmem:[%s3 + $0x70] sm:$0xff]
        %v769 = vld [vmem:[%s3 + $0x78] sm:$0xff]
        %v770 = vld [vmem:[%s4] sm:$0xff]
        %v771 = vld [vmem:[%s4 + $0x8] sm:$0xff]
        %v772 = vld [vmem:[%s4 + $0x10] sm:$0xff]
        %v773 = vld [vmem:[%s4 + $0x18] sm:$0xff]
        %v774 = vld [vmem:[%s4 + $0x20] sm:$0xff]
        %v775 = vld [vmem:[%s4 + $0x28] sm:$0xff]
        %v776 = vld [vmem:[%s4 + $0x30] sm:$0xff]
        %v777 = vld [vmem:[%s4 + $0x38] sm:$0xff]
        %779 = vset.pattern.permute.xlu0 0
        %780 = vperm.xlu0 %779, %v770
        %v781 = vpop.permute.xlu0 %780
        %784 = vset.pattern.permute.xlu0 0
        %785 = vperm.xlu0 %784, %v771
        %v786 = vpop.permute.xlu0 %785
        %789 = vset.pattern.permute.xlu0 0
        %790 = vperm.xlu0 %789, %v772
        %v791 = vpop.permute.xlu0 %790
        %794 = vset.pattern.permute.xlu0 0
        %795 = vperm.xlu0 %794, %v773
        %v796 = vpop.permute.xlu0 %795
        %799 = vset.pattern.permute.xlu0 0
        %800 = vperm.xlu0 %799, %v774
        %v801 = vpop.permute.xlu0 %800
        %804 = vset.pattern.permute.xlu0 0
        %805 = vperm.xlu0 %804, %v775
        %v806 = vpop.permute.xlu0 %805
        %809 = vset.pattern.permute.xlu0 0
        %810 = vperm.xlu0 %809, %v776
        %v811 = vpop.permute.xlu0 %810
        %814 = vset.pattern.permute.xlu0 0
        %815 = vperm.xlu0 %814, %v777
        %v816 = vpop.permute.xlu0 %815
        %818 = vmatpush.msra.mxu0 %v737
        %819 = vmatpush.msra.mxu0 %v736
        %820 = vmatpush.msra.mxu0 %v735
        %821 = vmatpush.msra.mxu0 %v734
        %822 = vmatpush.msra.mxu0 %v733
        %823 = vmatpush.msra.mxu0 %v732
        %824 = vmatpush.msra.mxu0 %v731
        %825 = vmatpush.msra.mxu0 %v730
        %826 = vmatpush.msra.mxu0 %v729
        %827 = vmatpush.msra.mxu0 %v728
        %828 = vmatpush.msra.mxu0 %v727
        %829 = vmatpush.msra.mxu0 %v726
        %830 = vmatpush.msra.mxu0 %v725
        %831 = vmatpush.msra.mxu0 %v724
        %832 = vmatpush.msra.mxu0 %v723
        %833 = vmatpush.msra.mxu0 %v722
        %834 = vmatmul.f32.gmra.mxu0 %v754
        %v835 = vpop.f32.mrf.mxu0
        %v836 = vadd.f32 %v781, %v835
        %837 = vmatmul.f32.gmra.mxu0 %v756
        %v838 = vpop.f32.mrf.mxu0
        %v839 = vadd.f32 %v786, %v838
        %840 = vmatmul.f32.gmra.mxu0 %v758
        %v841 = vpop.f32.mrf.mxu0
        %v842 = vadd.f32 %v791, %v841
        %843 = vmatmul.f32.gmra.mxu0 %v760
        %v844 = vpop.f32.mrf.mxu0
        %v845 = vadd.f32 %v796, %v844
        %846 = vmatmul.f32.gmra.mxu0 %v762
        %v847 = vpop.f32.mrf.mxu0
        %v848 = vadd.f32 %v801, %v847
        %849 = vmatmul.f32.gmra.mxu0 %v764
        %v850 = vpop.f32.mrf.mxu0
        %v851 = vadd.f32 %v806, %v850
        %852 = vmatmul.f32.gmra.mxu0 %v766
        %v853 = vpop.f32.mrf.mxu0
        %v854 = vadd.f32 %v811, %v853
        %855 = vmatmul.f32.gmra.mxu0 %v768
        %v856 = vpop.f32.mrf.mxu0
        %v857 = vadd.f32 %v816, %v856
        %858 = vdwg.mxu0
        %859 = vmatpush.msra.mxu0 %v753
        %860 = vmatpush.msra.mxu0 %v752
        %861 = vmatpush.msra.mxu0 %v751
        %862 = vmatpush.msra.mxu0 %v750
        %863 = vmatpush.msra.mxu0 %v749
        %864 = vmatpush.msra.mxu0 %v748
        %865 = vmatpush.msra.mxu0 %v747
        %866 = vmatpush.msra.mxu0 %v746
        %867 = vmatpush.msra.mxu0 %v745
        %868 = vmatpush.msra.mxu0 %v744
        %869 = vmatpush.msra.mxu0 %v743
        %870 = vmatpush.msra.mxu0 %v742
        %871 = vmatpush.msra.mxu0 %v741
        %872 = vmatpush.msra.mxu0 %v740
        %873 = vmatpush.msra.mxu0 %v739
        %874 = vmatpush.msra.mxu0 %v738
        %875 = vmatmul.f32.gmra.mxu0 %v755
        %v876 = vpop.f32.mrf.mxu0
        %v877 = vadd.f32 %v836, %v876
        %878 = vmatmul.f32.gmra.mxu0 %v757
        %v879 = vpop.f32.mrf.mxu0
        %v880 = vadd.f32 %v839, %v879
        %881 = vmatmul.f32.gmra.mxu0 %v759
        %v882 = vpop.f32.mrf.mxu0
        %v883 = vadd.f32 %v842, %v882
        %884 = vmatmul.f32.gmra.mxu0 %v761
        %v885 = vpop.f32.mrf.mxu0
        %v886 = vadd.f32 %v845, %v885
        %887 = vmatmul.f32.gmra.mxu0 %v763
        %v888 = vpop.f32.mrf.mxu0
        %v889 = vadd.f32 %v848, %v888
        %890 = vmatmul.f32.gmra.mxu0 %v765
        %v891 = vpop.f32.mrf.mxu0
        %v892 = vadd.f32 %v851, %v891
        %893 = vmatmul.f32.gmra.mxu0 %v767
        %v894 = vpop.f32.mrf.mxu0
        %v895 = vadd.f32 %v854, %v894
        %896 = vmatmul.f32.gmra.mxu0 %v769
        %v897 = vpop.f32.mrf.mxu0
        %v898 = vadd.f32 %v857, %v897
        %899 = vdwg.mxu0
        %v900 = vmul.f32 %v877, %v877
        %v901 = vmul.f32 %v880, %v880
        %v902 = vmul.f32 %v883, %v883
        %v903 = vmul.f32 %v886, %v886
        %v904 = vmul.f32 %v889, %v889
        %v905 = vmul.f32 %v892, %v892
        %v906 = vmul.f32 %v895, %v895
        %v907 = vmul.f32 %v898, %v898
        %v908 = vadd.f32 %v900, %v901
        %v909 = vadd.f32 %v908, %v902
        %v910 = vadd.f32 %v909, %v903
        %v911 = vadd.f32 %v910, %v904
        %v912 = vadd.f32 %v911, %v905
        %v913 = vadd.f32 %v912, %v906
        %v914 = vadd.f32 %v913, %v907
        %v915 = vrot.slane %v914, 4
        %v916 = vadd.f32 %v914, %v915
        %v917 = vrot.slane %v916, 2
        %v918 = vadd.f32 %v916, %v917
        %v919 = vrot.slane %v918, 1
        %v920 = vadd.f32 %v918, %v919
        %v921 = vmul.f32 %v920, 0.015625
        %922 = vst [vmem:[%s217] sm:$0x1] %v921
        %s923 = sand.u32 %s137, 1
        %s924 = scalar_lea.sflag [#allocation3], %s923
        %s925 = sand.u32 %s137, 1
        %s926 = scalar_lea.vmem [#allocation2], %s925
        // Predicated region
        $region41: #{tpu_custom_call.1} parent=39 // pred_check
          %p927 = pneg %p147
        $region42: #{tpu_custom_call.1} parent=39 // pred_check_branch
          %929 = sbr.rel (%p927) target = $region44
        $region43: #{tpu_custom_call.1} parent=39 // pred_region
          %931 = vsyncadd %s924, 0
          %s932 = scalar_lea.hbm %s5, %s19
          %s934 = sshll.u32 %s926, 4
          %s935 = int_to_ptr.vmem [resolvable:$true] %s934
          %s936 = sshll.u32 %s932, 4
          %s937 = int_to_ptr.hbm [resolvable:$true] %s936
          %939 = dma.vmem_to_hbm [thread:$0]  %s935, 16, %s937, %s924
        $region44: #{tpu_custom_call.1} parent=39 // pred_fallthru
          _
      $region40: #{tpu_custom_call.1} parent=5 // pred_fallthru
        _
      %p940 = scmp.le.s32.totalorder 2, %s14
      // Predicated region
      $region45: #{tpu_custom_call.1} parent=5 // pred_check
        %p941 = pneg %p940
      $region46: #{tpu_custom_call.1} parent=5 // pred_check_branch
        %943 = sbr.rel (%p941) target = $region48
      $region47: #{tpu_custom_call.1} parent=5 // pred_region
        %s944 = ssub.s32 %s14, 2
        // Predicated region
        $region49: #{tpu_custom_call.1} parent=47 // pred_check
          %p945 = pneg %p153
        $region50: #{tpu_custom_call.1} parent=47 // pred_check_branch
          %947 = sbr.rel (%p945) target = $region52
        $region51: #{tpu_custom_call.1} parent=47 // pred_region
          %s948 = sand.u32 %s138, 1
          %s949 = scalar_lea.sflag [#allocation3], %s948
          %s950 = sand.u32 %s138, 1
          %s951 = scalar_lea.vmem [#allocation2], %s950
          %953 = dma.done %s949, 16
        $region52: #{tpu_custom_call.1} parent=47 // pred_fallthru
          _
      $region48: #{tpu_custom_call.1} parent=5 // pred_fallthru
        _
    $region6: #{tpu_custom_call.1} parent=1 // loop_footer
      %s18 = sadd.s32 1, %s14
    $region7: #{tpu_custom_call.1} parent=1 // loop_footer_branch
      %13 = sbr.rel target = $region3
    $region8: #{tpu_custom_call.1} parent=1 // loop_exit
      _
    %954 = vsyncpa [#allocation3], 1
    %s955 = scalar_lea.sflag [#allocation3], 1
    %956 = vsyncpa %s955, 1

</llo_original>
